<compile_context>
chip_gen: v5e
topology: v5e:2x2
jax: 0.10.0
libtpu: 0.0.40
codegen_flags: <defaults>
</compile_context>

<pallas_src>
import functools

import jax
import jax.numpy as jnp
from jax import lax
from jax.experimental import pallas as pl
from jax.experimental.pallas import tpu as pltpu


def _canny_kernel(xm_ref, xt_ref, xb_ref, o_ref, *, low, high, th, H, Htot, W, HB):
    # xm_ref: (1, 3, th, W)  main row tile
    # xt_ref: (1, 3, HB, W)  8 rows just above the tile (clamped at the image top)
    # xb_ref: (1, 3, HB, W)  8 rows just below the tile (clamped at the image bottom)
    # o_ref : (1, 1, th, W)  grayscale edge map for this tile
    t = pl.program_id(1)

    rows = th + 2 * HB
    # Global row index of every assembled-buffer row (buffer row 0 == t*th - HB).
    g_buf = t * th - HB + lax.broadcasted_iota(jnp.int32, (rows, W), 0)
    above = g_buf < 0          # rows above the image  -> replicate image row 0
    below = g_buf >= Htot      # rows below the array  -> replicate last row

    # Global row index of every gradient row (gradient row 0 == t*th - 2).
    g_grad = t * th - 2 + lax.broadcasted_iota(jnp.int32, (th + 4, W), 0)
    inside = (g_grad >= 0) & (g_grad < H)   # rows outside the true image: zero magnitude

    m = dx = dy = None
    for c in range(3):  # fold the per-pixel channel max into a running best
        main = xm_ref[0, c]                  # (th, W)
        top = xt_ref[0, c]                   # (HB, W)
        bot = xb_ref[0, c]                   # (HB, W)

        img = jnp.concatenate([top, main, bot], axis=0)                    # (rows, W)
        img = jnp.where(above, jnp.broadcast_to(main[0:1, :], (rows, W)), img)
        img = jnp.where(below, jnp.broadcast_to(main[th - 1:th, :], (rows, W)), img)
        img = jnp.floor(img * 255.0)                                       # uint8 emulation

        # replicate left/right image columns (cv2 BORDER_REPLICATE)
        imgp = jnp.concatenate([img[:, 0:1], img, img[:, W - 1:W]], axis=1)  # (rows, W+2)

        # separable 3x3 Sobel: share the horizontal passes between gx and gy
        hdiff = imgp[:, 2:] - imgp[:, 0:W]                                   # (rows, W)
        hsm = imgp[:, 0:W] + 2.0 * imgp[:, 1:W + 1] + imgp[:, 2:]            # (rows, W)
        r0 = HB - 3   # gradients on buffer rows [HB-2, HB+th+2)  ->  th+4 rows
        gx_c = hdiff[r0:r0 + th + 4] + 2.0 * hdiff[r0 + 1:r0 + th + 5] + hdiff[r0 + 2:r0 + th + 6]
        gy_c = hsm[r0 + 2:r0 + th + 6] - hsm[r0:r0 + th + 4]
        mag_c = jnp.abs(gx_c) + jnp.abs(gy_c)                                # (th+4, W)

        if c == 0:
            m, dx, dy = mag_c, gx_c, gy_c
        else:
            upd = mag_c > m   # strict ">" reproduces the channel-0-wins-ties selection
            m = jnp.where(upd, mag_c, m)
            dx = jnp.where(upd, gx_c, dx)
            dy = jnp.where(upd, gy_c, dy)

    m = jnp.where(inside, m, 0.0)            # zero ring outside the image (rows)

    # --- non-maximum suppression on the th+2 rows surrounding the output tile -------
    R = th + 2
    zc = jnp.zeros((th + 4, 1), jnp.float32)
    mp = jnp.concatenate([zc, m, zc], axis=1)        # zero ring (columns), (th+4, W+2)

    m_c = m[1:1 + R]
    dx_c = dx[1:1 + R]
    dy_c = dy[1:1 + R]
    mU = m[0:R]
    mD = m[2:2 + R]
    mL = mp[1:1 + R, 0:W]
    mR = mp[1:1 + R, 2:2 + W]
    mUL = mp[0:R, 0:W]
    mUR = mp[0:R, 2:2 + W]
    mDL = mp[2:2 + R, 0:W]
    mDR = mp[2:2 + R, 2:2 + W]

    adx = jnp.abs(dx_c)
    ady = jnp.abs(dy_c)
    tan22 = 0.4142135623730951
    tan67 = 2.414213562373095
    horiz = ady <= tan22 * adx
    vert = ady >= tan67 * adx
    same_sign = (dx_c * dy_c) >= 0.0
    n1 = jnp.where(horiz, mL, jnp.where(vert, mU, jnp.where(same_sign, mUL, mUR)))
    n2 = jnp.where(horiz, mR, jnp.where(vert, mD, jnp.where(same_sign, mDR, mDL)))
    is_max = (m_c > n1) & (m_c >= n2)

    strong = is_max & (m_c > high)
    weak = is_max & (m_c > low) & jnp.logical_not(strong)

    # --- double threshold + single-pass hysteresis ----------------------------------
    sf = strong.astype(jnp.float32)                  # (R, W)
    zc2 = jnp.zeros((R, 1), jnp.float32)
    sp = jnp.concatenate([zc2, sf, zc2], axis=1)     # (R, W+2)
    neigh = (sp[0:th, 0:W] + sp[0:th, 1:W + 1] + sp[0:th, 2:W + 2]
             + sp[1:th + 1, 0:W] + sp[1:th + 1, 2:W + 2]
             + sp[2:th + 2, 0:W] + sp[2:th + 2, 1:W + 1] + sp[2:th + 2, 2:W + 2])

    final = strong[1:th + 1] | (weak[1:th + 1] & (neigh > 0.0))
    o_ref[...] = final.astype(jnp.float32).reshape(1, 1, th, W)


def canny_filter(x, low_threshold=0.1 * 255.0, high_threshold=0.3 * 255.0, row_tile=None):
    """x: (B, 3, H, W) float32 in [0,1]  ->  (B, 3, H, W) float32 edge map (0/1)."""
    B, C, H, W = x.shape
    assert C == 3, "CannyFilterOpenCV expects RGB input"

    # cv2 floors float thresholds (L2gradient=False path)
    low = float(int(low_threshold))
    high = float(int(high_threshold))

    HB = 8
    Hp = ((H + HB - 1) // HB) * HB
    if Hp != H:
        # Align rows to the sublane size only; the extra (edge-replicated) rows are
        # treated as "outside the image" in-kernel and cropped afterwards.
        x = jnp.pad(x, ((0, 0), (0, 0), (0, Hp - H), (0, 0)), mode="edge")

    if row_tile is None:
        # Largest row tile (<=256 rows, tile area capped) that divides the padded height.
        area_cap = 256 * 1024
        row_tile = HB
        for cand in (256, 128, 64, 32, 16, 8):
            if Hp % cand == 0 and cand * W <= area_cap:
                row_tile = cand
                break
        row_tile = min(row_tile, Hp)
    assert row_tile % HB == 0 and Hp % row_tile == 0, "row_tile must be a multiple of 8 dividing padded H"

    th = row_tile
    nt = Hp // th
    nb_h = Hp // HB          # number of 8-row halo blocks along H

    kernel = functools.partial(_canny_kernel, low=low, high=high, th=th,
                               H=H, Htot=Hp, W=W, HB=HB)

    out = pl.pallas_call(
        kernel,
        out_shape=jax.ShapeDtypeStruct((B, 1, Hp, W), jnp.float32),
        grid_spec=pltpu.PrefetchScalarGridSpec(
            num_scalar_prefetch=0,
            grid=(B, nt),
            in_specs=[
                # main row tile
                pl.BlockSpec((1, 3, th, W), lambda b, t: (b, 0, t, 0)),
                # 8-row halo just above the tile (clamped at the image top)
                pl.BlockSpec((1, 3, HB, W),
                             lambda b, t: (b, 0, jnp.maximum(t * (th // HB) - 1, 0), 0)),
                # 8-row halo just below the tile (clamped at the image bottom)
                pl.BlockSpec((1, 3, HB, W),
                             lambda b, t: (b, 0, jnp.minimum((t + 1) * (th // HB), nb_h - 1), 0)),
            ],
            out_specs=pl.BlockSpec((1, 1, th, W), lambda b, t: (b, 0, t, 0)),
        ),
        compiler_params=pltpu.CompilerParams(
            dimension_semantics=("parallel", "parallel"),
            vmem_limit_bytes=48 * 1024 * 1024,
        ),
    )(x, x, x)

    edge = out[:, :, :H, :]                          # crop padded rows (if any)
    return jnp.broadcast_to(edge, (B, 3, H, W))      # GRAY2RGB replication outside the kernel


if __name__ == "__main__":
    key = jax.random.PRNGKey(0)
    B, C, H, W = 2, 3, 16, 16
    x = jax.random.uniform(key, (B, C, H, W), dtype=jnp.float32)

    # row_tile=8 -> two row tiles per image, exercising the halo / multi-tile path.
    edges = canny_filter(x, row_tile=8)
    edges = jax.block_until_ready(edges)

    assert edges.shape == (B, 3, H, W)
    assert edges.dtype == jnp.float32
    assert bool(jnp.all((edges == 0.0) | (edges == 1.0)))
    print("KERNEL_OK")
</pallas_src>

<mosaic_0001>
module attributes {stable_mosaic.version = 11 : i64} {
  func.func @_canny_kernel(%arg0: i32, %arg1: i32, %arg2: memref<1x3x8x16xf32, #tpu.memory_space<vmem>>, %arg3: memref<1x3x8x16xf32, #tpu.memory_space<vmem>>, %arg4: memref<1x3x8x16xf32, #tpu.memory_space<vmem>>, %arg5: memref<1x1x8x16xf32, #tpu.memory_space<vmem>>) attributes {dimension_semantics = [#tpu.dimension_semantics<parallel>, #tpu.dimension_semantics<parallel>], iteration_bounds = array<i64: 2, 2>, scalar_prefetch = 0 : i64, scratch_operands = 0 : i64, tpu.core_type = #tpu.core_type<tc>, window_params = [{transform_indices = @transform_0, window_bounds = array<i64: 1, 3, 8, 16>}, {transform_indices = @transform_1, window_bounds = array<i64: 1, 3, 8, 16>}, {transform_indices = @transform_2, window_bounds = array<i64: 1, 3, 8, 16>}, {transform_indices = @transform_3, window_bounds = array<i64: 1, 1, 8, 16>}]} {
    %c8_i32 = arith.constant 8 : i32
    %0 = arith.muli %arg1, %c8_i32 : i32
    %c8_i32_0 = arith.constant 8 : i32
    %1 = arith.subi %0, %c8_i32_0 : i32
    %2 = tpu.iota {dimensions = array<i32: 0>} : vector<24x16xi32>
    %3 = vector.broadcast %1 : i32 to vector<24x16xi32>
    %4 = arith.addi %3, %2 : vector<24x16xi32>
    %c0_i32 = arith.constant 0 : i32
    %5 = vector.broadcast %c0_i32 : i32 to vector<24x16xi32>
    %6 = arith.cmpi slt, %4, %5 : vector<24x16xi32>
    %c16_i32 = arith.constant 16 : i32
    %7 = vector.broadcast %c16_i32 : i32 to vector<24x16xi32>
    %8 = arith.cmpi sge, %4, %7 : vector<24x16xi32>
    %c8_i32_1 = arith.constant 8 : i32
    %9 = arith.muli %arg1, %c8_i32_1 : i32
    %c2_i32 = arith.constant 2 : i32
    %10 = arith.subi %9, %c2_i32 : i32
    %11 = tpu.iota {dimensions = array<i32: 0>} : vector<12x16xi32>
    %12 = vector.broadcast %10 : i32 to vector<12x16xi32>
    %13 = arith.addi %12, %11 : vector<12x16xi32>
    %c0_i32_2 = arith.constant 0 : i32
    %14 = vector.broadcast %c0_i32_2 : i32 to vector<12x16xi32>
    %15 = arith.cmpi sge, %13, %14 : vector<12x16xi32>
    %c16_i32_3 = arith.constant 16 : i32
    %16 = vector.broadcast %c16_i32_3 : i32 to vector<12x16xi32>
    %17 = arith.cmpi slt, %13, %16 : vector<12x16xi32>
    %18 = arith.andi %15, %17 : vector<12x16xi1>
    %c0 = arith.constant 0 : index
    %c0_4 = arith.constant 0 : index
    %c0_5 = arith.constant 0 : index
    %c0_6 = arith.constant 0 : index
    %19 = vector.load %arg2[%c0, %c0_4, %c0_5, %c0_6] : memref<1x3x8x16xf32, #tpu.memory_space<vmem>>, vector<1x1x8x16xf32>
    %20 = vector.shape_cast %19 : vector<1x1x8x16xf32> to vector<8x16xf32>
    %c0_7 = arith.constant 0 : index
    %c0_8 = arith.constant 0 : index
    %c0_9 = arith.constant 0 : index
    %c0_10 = arith.constant 0 : index
    %21 = vector.load %arg3[%c0_7, %c0_8, %c0_9, %c0_10] : memref<1x3x8x16xf32, #tpu.memory_space<vmem>>, vector<1x1x8x16xf32>
    %22 = vector.shape_cast %21 : vector<1x1x8x16xf32> to vector<8x16xf32>
    %c0_11 = arith.constant 0 : index
    %c0_12 = arith.constant 0 : index
    %c0_13 = arith.constant 0 : index
    %c0_14 = arith.constant 0 : index
    %23 = vector.load %arg4[%c0_11, %c0_12, %c0_13, %c0_14] : memref<1x3x8x16xf32, #tpu.memory_space<vmem>>, vector<1x1x8x16xf32>
    %24 = vector.shape_cast %23 : vector<1x1x8x16xf32> to vector<8x16xf32>
    %25 = tpu.concatenate %22, %20, %24 in 0 : vector<8x16xf32>, vector<8x16xf32>, vector<8x16xf32> -> vector<24x16xf32>
    %26 = vector.extract_strided_slice %20 {offsets = [0, 0], sizes = [1, 16], strides = [1, 1]} : vector<8x16xf32> to vector<1x16xf32>
    %27 = vector.shape_cast %26 : vector<1x16xf32> to vector<1x16xf32>
    %28 = vector.broadcast %27 : vector<1x16xf32> to vector<24x16xf32>
    %29 = arith.select %6, %28, %25 : vector<24x16xi1>, vector<24x16xf32>
    %30 = vector.extract_strided_slice %20 {offsets = [7, 0], sizes = [1, 16], strides = [1, 1]} : vector<8x16xf32> to vector<1x16xf32>
    %31 = vector.shape_cast %30 : vector<1x16xf32> to vector<1x16xf32>
    %32 = vector.broadcast %31 : vector<1x16xf32> to vector<24x16xf32>
    %33 = arith.select %8, %32, %29 : vector<24x16xi1>, vector<24x16xf32>
    %cst = arith.constant 2.550000e+02 : f32
    %34 = vector.broadcast %cst : f32 to vector<24x16xf32>
    %35 = arith.mulf %33, %34 : vector<24x16xf32>
    %36 = math.floor %35 : vector<24x16xf32>
    %37 = vector.extract_strided_slice %36 {offsets = [0, 0], sizes = [24, 1], strides = [1, 1]} : vector<24x16xf32> to vector<24x1xf32>
    %38 = vector.extract_strided_slice %36 {offsets = [0, 15], sizes = [24, 1], strides = [1, 1]} : vector<24x16xf32> to vector<24x1xf32>
    %39 = tpu.concatenate %37, %36, %38 in 1 : vector<24x1xf32>, vector<24x16xf32>, vector<24x1xf32> -> vector<24x18xf32>
    %40 = vector.extract_strided_slice %39 {offsets = [0, 2], sizes = [24, 16], strides = [1, 1]} : vector<24x18xf32> to vector<24x16xf32>
    %41 = vector.extract_strided_slice %39 {offsets = [0, 0], sizes = [24, 16], strides = [1, 1]} : vector<24x18xf32> to vector<24x16xf32>
    %42 = arith.subf %40, %41 : vector<24x16xf32>
    %43 = vector.extract_strided_slice %39 {offsets = [0, 0], sizes = [24, 16], strides = [1, 1]} : vector<24x18xf32> to vector<24x16xf32>
    %44 = vector.extract_strided_slice %39 {offsets = [0, 1], sizes = [24, 16], strides = [1, 1]} : vector<24x18xf32> to vector<24x16xf32>
    %cst_15 = arith.constant 2.000000e+00 : f32
    %45 = vector.broadcast %cst_15 : f32 to vector<24x16xf32>
    %46 = arith.mulf %45, %44 : vector<24x16xf32>
    %47 = arith.addf %43, %46 : vector<24x16xf32>
    %48 = vector.extract_strided_slice %39 {offsets = [0, 2], sizes = [24, 16], strides = [1, 1]} : vector<24x18xf32> to vector<24x16xf32>
    %49 = arith.addf %47, %48 : vector<24x16xf32>
    %50 = vector.extract_strided_slice %42 {offsets = [5, 0], sizes = [12, 16], strides = [1, 1]} : vector<24x16xf32> to vector<12x16xf32>
    %51 = vector.extract_strided_slice %42 {offsets = [6, 0], sizes = [12, 16], strides = [1, 1]} : vector<24x16xf32> to vector<12x16xf32>
    %cst_16 = arith.constant 2.000000e+00 : f32
    %52 = vector.broadcast %cst_16 : f32 to vector<12x16xf32>
    %53 = arith.mulf %52, %51 : vector<12x16xf32>
    %54 = arith.addf %50, %53 : vector<12x16xf32>
    %55 = vector.extract_strided_slice %42 {offsets = [7, 0], sizes = [12, 16], strides = [1, 1]} : vector<24x16xf32> to vector<12x16xf32>
    %56 = arith.addf %54, %55 : vector<12x16xf32>
    %57 = vector.extract_strided_slice %49 {offsets = [7, 0], sizes = [12, 16], strides = [1, 1]} : vector<24x16xf32> to vector<12x16xf32>
    %58 = vector.extract_strided_slice %49 {offsets = [5, 0], sizes = [12, 16], strides = [1, 1]} : vector<24x16xf32> to vector<12x16xf32>
    %59 = arith.subf %57, %58 : vector<12x16xf32>
    %60 = math.absf %56 : vector<12x16xf32>
    %61 = math.absf %59 : vector<12x16xf32>
    %62 = arith.addf %60, %61 : vector<12x16xf32>
    %c0_17 = arith.constant 0 : index
    %c1 = arith.constant 1 : index
    %c0_18 = arith.constant 0 : index
    %c0_19 = arith.constant 0 : index
    %63 = vector.load %arg2[%c0_17, %c1, %c0_18, %c0_19] : memref<1x3x8x16xf32, #tpu.memory_space<vmem>>, vector<1x1x8x16xf32>
    %64 = vector.shape_cast %63 : vector<1x1x8x16xf32> to vector<8x16xf32>
    %c0_20 = arith.constant 0 : index
    %c1_21 = arith.constant 1 : index
    %c0_22 = arith.constant 0 : index
    %c0_23 = arith.constant 0 : index
    %65 = vector.load %arg3[%c0_20, %c1_21, %c0_22, %c0_23] : memref<1x3x8x16xf32, #tpu.memory_space<vmem>>, vector<1x1x8x16xf32>
    %66 = vector.shape_cast %65 : vector<1x1x8x16xf32> to vector<8x16xf32>
    %c0_24 = arith.constant 0 : index
    %c1_25 = arith.constant 1 : index
    %c0_26 = arith.constant 0 : index
    %c0_27 = arith.constant 0 : index
    %67 = vector.load %arg4[%c0_24, %c1_25, %c0_26, %c0_27] : memref<1x3x8x16xf32, #tpu.memory_space<vmem>>, vector<1x1x8x16xf32>
    %68 = vector.shape_cast %67 : vector<1x1x8x16xf32> to vector<8x16xf32>
    %69 = tpu.concatenate %66, %64, %68 in 0 : vector<8x16xf32>, vector<8x16xf32>, vector<8x16xf32> -> vector<24x16xf32>
    %70 = vector.extract_strided_slice %64 {offsets = [0, 0], sizes = [1, 16], strides = [1, 1]} : vector<8x16xf32> to vector<1x16xf32>
    %71 = vector.shape_cast %70 : vector<1x16xf32> to vector<1x16xf32>
    %72 = vector.broadcast %71 : vector<1x16xf32> to vector<24x16xf32>
    %73 = arith.select %6, %72, %69 : vector<24x16xi1>, vector<24x16xf32>
    %74 = vector.extract_strided_slice %64 {offsets = [7, 0], sizes = [1, 16], strides = [1, 1]} : vector<8x16xf32> to vector<1x16xf32>
    %75 = vector.shape_cast %74 : vector<1x16xf32> to vector<1x16xf32>
    %76 = vector.broadcast %75 : vector<1x16xf32> to vector<24x16xf32>
    %77 = arith.select %8, %76, %73 : vector<24x16xi1>, vector<24x16xf32>
    %cst_28 = arith.constant 2.550000e+02 : f32
    %78 = vector.broadcast %cst_28 : f32 to vector<24x16xf32>
    %79 = arith.mulf %77, %78 : vector<24x16xf32>
    %80 = math.floor %79 : vector<24x16xf32>
    %81 = vector.extract_strided_slice %80 {offsets = [0, 0], sizes = [24, 1], strides = [1, 1]} : vector<24x16xf32> to vector<24x1xf32>
    %82 = vector.extract_strided_slice %80 {offsets = [0, 15], sizes = [24, 1], strides = [1, 1]} : vector<24x16xf32> to vector<24x1xf32>
    %83 = tpu.concatenate %81, %80, %82 in 1 : vector<24x1xf32>, vector<24x16xf32>, vector<24x1xf32> -> vector<24x18xf32>
    %84 = vector.extract_strided_slice %83 {offsets = [0, 2], sizes = [24, 16], strides = [1, 1]} : vector<24x18xf32> to vector<24x16xf32>
    %85 = vector.extract_strided_slice %83 {offsets = [0, 0], sizes = [24, 16], strides = [1, 1]} : vector<24x18xf32> to vector<24x16xf32>
    %86 = arith.subf %84, %85 : vector<24x16xf32>
    %87 = vector.extract_strided_slice %83 {offsets = [0, 0], sizes = [24, 16], strides = [1, 1]} : vector<24x18xf32> to vector<24x16xf32>
    %88 = vector.extract_strided_slice %83 {offsets = [0, 1], sizes = [24, 16], strides = [1, 1]} : vector<24x18xf32> to vector<24x16xf32>
    %cst_29 = arith.constant 2.000000e+00 : f32
    %89 = vector.broadcast %cst_29 : f32 to vector<24x16xf32>
    %90 = arith.mulf %89, %88 : vector<24x16xf32>
    %91 = arith.addf %87, %90 : vector<24x16xf32>
    %92 = vector.extract_strided_slice %83 {offsets = [0, 2], sizes = [24, 16], strides = [1, 1]} : vector<24x18xf32> to vector<24x16xf32>
    %93 = arith.addf %91, %92 : vector<24x16xf32>
    %94 = vector.extract_strided_slice %86 {offsets = [5, 0], sizes = [12, 16], strides = [1, 1]} : vector<24x16xf32> to vector<12x16xf32>
    %95 = vector.extract_strided_slice %86 {offsets = [6, 0], sizes = [12, 16], strides = [1, 1]} : vector<24x16xf32> to vector<12x16xf32>
    %cst_30 = arith.constant 2.000000e+00 : f32
    %96 = vector.broadcast %cst_30 : f32 to vector<12x16xf32>
    %97 = arith.mulf %96, %95 : vector<12x16xf32>
    %98 = arith.addf %94, %97 : vector<12x16xf32>
    %99 = vector.extract_strided_slice %86 {offsets = [7, 0], sizes = [12, 16], strides = [1, 1]} : vector<24x16xf32> to vector<12x16xf32>
    %100 = arith.addf %98, %99 : vector<12x16xf32>
    %101 = vector.extract_strided_slice %93 {offsets = [7, 0], sizes = [12, 16], strides = [1, 1]} : vector<24x16xf32> to vector<12x16xf32>
    %102 = vector.extract_strided_slice %93 {offsets = [5, 0], sizes = [12, 16], strides = [1, 1]} : vector<24x16xf32> to vector<12x16xf32>
    %103 = arith.subf %101, %102 : vector<12x16xf32>
    %104 = math.absf %100 : vector<12x16xf32>
    %105 = math.absf %103 : vector<12x16xf32>
    %106 = arith.addf %104, %105 : vector<12x16xf32>
    %107 = arith.cmpf ogt, %106, %62 : vector<12x16xf32>
    %108 = arith.select %107, %106, %62 : vector<12x16xi1>, vector<12x16xf32>
    %109 = arith.select %107, %100, %56 : vector<12x16xi1>, vector<12x16xf32>
    %110 = arith.select %107, %103, %59 : vector<12x16xi1>, vector<12x16xf32>
    %c0_31 = arith.constant 0 : index
    %c2 = arith.constant 2 : index
    %c0_32 = arith.constant 0 : index
    %c0_33 = arith.constant 0 : index
    %111 = vector.load %arg2[%c0_31, %c2, %c0_32, %c0_33] : memref<1x3x8x16xf32, #tpu.memory_space<vmem>>, vector<1x1x8x16xf32>
    %112 = vector.shape_cast %111 : vector<1x1x8x16xf32> to vector<8x16xf32>
    %c0_34 = arith.constant 0 : index
    %c2_35 = arith.constant 2 : index
    %c0_36 = arith.constant 0 : index
    %c0_37 = arith.constant 0 : index
    %113 = vector.load %arg3[%c0_34, %c2_35, %c0_36, %c0_37] : memref<1x3x8x16xf32, #tpu.memory_space<vmem>>, vector<1x1x8x16xf32>
    %114 = vector.shape_cast %113 : vector<1x1x8x16xf32> to vector<8x16xf32>
    %c0_38 = arith.constant 0 : index
    %c2_39 = arith.constant 2 : index
    %c0_40 = arith.constant 0 : index
    %c0_41 = arith.constant 0 : index
    %115 = vector.load %arg4[%c0_38, %c2_39, %c0_40, %c0_41] : memref<1x3x8x16xf32, #tpu.memory_space<vmem>>, vector<1x1x8x16xf32>
    %116 = vector.shape_cast %115 : vector<1x1x8x16xf32> to vector<8x16xf32>
    %117 = tpu.concatenate %114, %112, %116 in 0 : vector<8x16xf32>, vector<8x16xf32>, vector<8x16xf32> -> vector<24x16xf32>
    %118 = vector.extract_strided_slice %112 {offsets = [0, 0], sizes = [1, 16], strides = [1, 1]} : vector<8x16xf32> to vector<1x16xf32>
    %119 = vector.shape_cast %118 : vector<1x16xf32> to vector<1x16xf32>
    %120 = vector.broadcast %119 : vector<1x16xf32> to vector<24x16xf32>
    %121 = arith.select %6, %120, %117 : vector<24x16xi1>, vector<24x16xf32>
    %122 = vector.extract_strided_slice %112 {offsets = [7, 0], sizes = [1, 16], strides = [1, 1]} : vector<8x16xf32> to vector<1x16xf32>
    %123 = vector.shape_cast %122 : vector<1x16xf32> to vector<1x16xf32>
    %124 = vector.broadcast %123 : vector<1x16xf32> to vector<24x16xf32>
    %125 = arith.select %8, %124, %121 : vector<24x16xi1>, vector<24x16xf32>
    %cst_42 = arith.constant 2.550000e+02 : f32
    %126 = vector.broadcast %cst_42 : f32 to vector<24x16xf32>
    %127 = arith.mulf %125, %126 : vector<24x16xf32>
    %128 = math.floor %127 : vector<24x16xf32>
    %129 = vector.extract_strided_slice %128 {offsets = [0, 0], sizes = [24, 1], strides = [1, 1]} : vector<24x16xf32> to vector<24x1xf32>
    %130 = vector.extract_strided_slice %128 {offsets = [0, 15], sizes = [24, 1], strides = [1, 1]} : vector<24x16xf32> to vector<24x1xf32>
    %131 = tpu.concatenate %129, %128, %130 in 1 : vector<24x1xf32>, vector<24x16xf32>, vector<24x1xf32> -> vector<24x18xf32>
    %132 = vector.extract_strided_slice %131 {offsets = [0, 2], sizes = [24, 16], strides = [1, 1]} : vector<24x18xf32> to vector<24x16xf32>
    %133 = vector.extract_strided_slice %131 {offsets = [0, 0], sizes = [24, 16], strides = [1, 1]} : vector<24x18xf32> to vector<24x16xf32>
    %134 = arith.subf %132, %133 : vector<24x16xf32>
    %135 = vector.extract_strided_slice %131 {offsets = [0, 0], sizes = [24, 16], strides = [1, 1]} : vector<24x18xf32> to vector<24x16xf32>
    %136 = vector.extract_strided_slice %131 {offsets = [0, 1], sizes = [24, 16], strides = [1, 1]} : vector<24x18xf32> to vector<24x16xf32>
    %cst_43 = arith.constant 2.000000e+00 : f32
    %137 = vector.broadcast %cst_43 : f32 to vector<24x16xf32>
    %138 = arith.mulf %137, %136 : vector<24x16xf32>
    %139 = arith.addf %135, %138 : vector<24x16xf32>
    %140 = vector.extract_strided_slice %131 {offsets = [0, 2], sizes = [24, 16], strides = [1, 1]} : vector<24x18xf32> to vector<24x16xf32>
    %141 = arith.addf %139, %140 : vector<24x16xf32>
    %142 = vector.extract_strided_slice %134 {offsets = [5, 0], sizes = [12, 16], strides = [1, 1]} : vector<24x16xf32> to vector<12x16xf32>
    %143 = vector.extract_strided_slice %134 {offsets = [6, 0], sizes = [12, 16], strides = [1, 1]} : vector<24x16xf32> to vector<12x16xf32>
    %cst_44 = arith.constant 2.000000e+00 : f32
    %144 = vector.broadcast %cst_44 : f32 to vector<12x16xf32>
    %145 = arith.mulf %144, %143 : vector<12x16xf32>
    %146 = arith.addf %142, %145 : vector<12x16xf32>
    %147 = vector.extract_strided_slice %134 {offsets = [7, 0], sizes = [12, 16], strides = [1, 1]} : vector<24x16xf32> to vector<12x16xf32>
    %148 = arith.addf %146, %147 : vector<12x16xf32>
    %149 = vector.extract_strided_slice %141 {offsets = [7, 0], sizes = [12, 16], strides = [1, 1]} : vector<24x16xf32> to vector<12x16xf32>
    %150 = vector.extract_strided_slice %141 {offsets = [5, 0], sizes = [12, 16], strides = [1, 1]} : vector<24x16xf32> to vector<12x16xf32>
    %151 = arith.subf %149, %150 : vector<12x16xf32>
    %152 = math.absf %148 : vector<12x16xf32>
    %153 = math.absf %151 : vector<12x16xf32>
    %154 = arith.addf %152, %153 : vector<12x16xf32>
    %155 = arith.cmpf ogt, %154, %108 : vector<12x16xf32>
    %156 = arith.select %155, %154, %108 : vector<12x16xi1>, vector<12x16xf32>
    %157 = arith.select %155, %148, %109 : vector<12x16xi1>, vector<12x16xf32>
    %158 = arith.select %155, %151, %110 : vector<12x16xi1>, vector<12x16xf32>
    %cst_45 = arith.constant 0.000000e+00 : f32
    %159 = vector.broadcast %cst_45 : f32 to vector<12x16xf32>
    %160 = arith.select %18, %156, %159 : vector<12x16xi1>, vector<12x16xf32>
    %cst_46 = arith.constant 0.000000e+00 : f32
    %161 = vector.broadcast %cst_46 : f32 to vector<12x1xf32>
    %162 = tpu.concatenate %161, %160, %161 in 1 : vector<12x1xf32>, vector<12x16xf32>, vector<12x1xf32> -> vector<12x18xf32>
    %163 = vector.extract_strided_slice %160 {offsets = [1, 0], sizes = [10, 16], strides = [1, 1]} : vector<12x16xf32> to vector<10x16xf32>
    %164 = vector.extract_strided_slice %157 {offsets = [1, 0], sizes = [10, 16], strides = [1, 1]} : vector<12x16xf32> to vector<10x16xf32>
    %165 = vector.extract_strided_slice %158 {offsets = [1, 0], sizes = [10, 16], strides = [1, 1]} : vector<12x16xf32> to vector<10x16xf32>
    %166 = vector.extract_strided_slice %160 {offsets = [0, 0], sizes = [10, 16], strides = [1, 1]} : vector<12x16xf32> to vector<10x16xf32>
    %167 = vector.extract_strided_slice %160 {offsets = [2, 0], sizes = [10, 16], strides = [1, 1]} : vector<12x16xf32> to vector<10x16xf32>
    %168 = vector.extract_strided_slice %162 {offsets = [1, 0], sizes = [10, 16], strides = [1, 1]} : vector<12x18xf32> to vector<10x16xf32>
    %169 = vector.extract_strided_slice %162 {offsets = [1, 2], sizes = [10, 16], strides = [1, 1]} : vector<12x18xf32> to vector<10x16xf32>
    %170 = vector.extract_strided_slice %162 {offsets = [0, 0], sizes = [10, 16], strides = [1, 1]} : vector<12x18xf32> to vector<10x16xf32>
    %171 = vector.extract_strided_slice %162 {offsets = [0, 2], sizes = [10, 16], strides = [1, 1]} : vector<12x18xf32> to vector<10x16xf32>
    %172 = vector.extract_strided_slice %162 {offsets = [2, 0], sizes = [10, 16], strides = [1, 1]} : vector<12x18xf32> to vector<10x16xf32>
    %173 = vector.extract_strided_slice %162 {offsets = [2, 2], sizes = [10, 16], strides = [1, 1]} : vector<12x18xf32> to vector<10x16xf32>
    %174 = math.absf %164 : vector<10x16xf32>
    %175 = math.absf %165 : vector<10x16xf32>
    %cst_47 = arith.constant 0.414213568 : f32
    %176 = vector.broadcast %cst_47 : f32 to vector<10x16xf32>
    %177 = arith.mulf %176, %174 : vector<10x16xf32>
    %178 = arith.cmpf ole, %175, %177 : vector<10x16xf32>
    %cst_48 = arith.constant 2.41421366 : f32
    %179 = vector.broadcast %cst_48 : f32 to vector<10x16xf32>
    %180 = arith.mulf %179, %174 : vector<10x16xf32>
    %181 = arith.cmpf oge, %175, %180 : vector<10x16xf32>
    %182 = arith.mulf %164, %165 : vector<10x16xf32>
    %cst_49 = arith.constant 0.000000e+00 : f32
    %183 = vector.broadcast %cst_49 : f32 to vector<10x16xf32>
    %184 = arith.cmpf oge, %182, %183 : vector<10x16xf32>
    %185 = arith.select %184, %170, %171 : vector<10x16xi1>, vector<10x16xf32>
    %186 = arith.select %181, %166, %185 : vector<10x16xi1>, vector<10x16xf32>
    %187 = arith.select %178, %168, %186 : vector<10x16xi1>, vector<10x16xf32>
    %188 = arith.select %184, %173, %172 : vector<10x16xi1>, vector<10x16xf32>
    %189 = arith.select %181, %167, %188 : vector<10x16xi1>, vector<10x16xf32>
    %190 = arith.select %178, %169, %189 : vector<10x16xi1>, vector<10x16xf32>
    %191 = arith.cmpf ogt, %163, %187 : vector<10x16xf32>
    %192 = arith.cmpf oge, %163, %190 : vector<10x16xf32>
    %193 = arith.andi %191, %192 : vector<10x16xi1>
    %cst_50 = arith.constant 7.600000e+01 : f32
    %194 = vector.broadcast %cst_50 : f32 to vector<10x16xf32>
    %195 = arith.cmpf ogt, %163, %194 : vector<10x16xf32>
    %196 = arith.andi %193, %195 : vector<10x16xi1>
    %cst_51 = arith.constant 2.500000e+01 : f32
    %197 = vector.broadcast %cst_51 : f32 to vector<10x16xf32>
    %198 = arith.cmpf ogt, %163, %197 : vector<10x16xf32>
    %199 = arith.andi %193, %198 : vector<10x16xi1>
    %cst_52 = arith.constant dense<true> : vector<10x16xi1>
    %200 = arith.xori %196, %cst_52 : vector<10x16xi1>
    %201 = arith.andi %199, %200 : vector<10x16xi1>
    %202 = arith.extui %196 : vector<10x16xi1> to vector<10x16xi32>
    %203 = arith.sitofp %202 : vector<10x16xi32> to vector<10x16xf32>
    %cst_53 = arith.constant 0.000000e+00 : f32
    %204 = vector.broadcast %cst_53 : f32 to vector<10x1xf32>
    %205 = tpu.concatenate %204, %203, %204 in 1 : vector<10x1xf32>, vector<10x16xf32>, vector<10x1xf32> -> vector<10x18xf32>
    %206 = vector.extract_strided_slice %205 {offsets = [0, 0], sizes = [8, 16], strides = [1, 1]} : vector<10x18xf32> to vector<8x16xf32>
    %207 = vector.extract_strided_slice %205 {offsets = [0, 1], sizes = [8, 16], strides = [1, 1]} : vector<10x18xf32> to vector<8x16xf32>
    %208 = arith.addf %206, %207 : vector<8x16xf32>
    %209 = vector.extract_strided_slice %205 {offsets = [0, 2], sizes = [8, 16], strides = [1, 1]} : vector<10x18xf32> to vector<8x16xf32>
    %210 = arith.addf %208, %209 : vector<8x16xf32>
    %211 = vector.extract_strided_slice %205 {offsets = [1, 0], sizes = [8, 16], strides = [1, 1]} : vector<10x18xf32> to vector<8x16xf32>
    %212 = arith.addf %210, %211 : vector<8x16xf32>
    %213 = vector.extract_strided_slice %205 {offsets = [1, 2], sizes = [8, 16], strides = [1, 1]} : vector<10x18xf32> to vector<8x16xf32>
    %214 = arith.addf %212, %213 : vector<8x16xf32>
    %215 = vector.extract_strided_slice %205 {offsets = [2, 0], sizes = [8, 16], strides = [1, 1]} : vector<10x18xf32> to vector<8x16xf32>
    %216 = arith.addf %214, %215 : vector<8x16xf32>
    %217 = vector.extract_strided_slice %205 {offsets = [2, 1], sizes = [8, 16], strides = [1, 1]} : vector<10x18xf32> to vector<8x16xf32>
    %218 = arith.addf %216, %217 : vector<8x16xf32>
    %219 = vector.extract_strided_slice %205 {offsets = [2, 2], sizes = [8, 16], strides = [1, 1]} : vector<10x18xf32> to vector<8x16xf32>
    %220 = arith.addf %218, %219 : vector<8x16xf32>
    %221 = vector.extract_strided_slice %196 {offsets = [1, 0], sizes = [8, 16], strides = [1, 1]} : vector<10x16xi1> to vector<8x16xi1>
    %222 = vector.extract_strided_slice %201 {offsets = [1, 0], sizes = [8, 16], strides = [1, 1]} : vector<10x16xi1> to vector<8x16xi1>
    %cst_54 = arith.constant 0.000000e+00 : f32
    %223 = vector.broadcast %cst_54 : f32 to vector<8x16xf32>
    %224 = arith.cmpf ogt, %220, %223 : vector<8x16xf32>
    %225 = arith.andi %222, %224 : vector<8x16xi1>
    %226 = arith.ori %221, %225 : vector<8x16xi1>
    %227 = arith.extui %226 : vector<8x16xi1> to vector<8x16xi32>
    %228 = arith.sitofp %227 : vector<8x16xi32> to vector<8x16xf32>
    %229 = vector.shape_cast %228 : vector<8x16xf32> to vector<1x1x8x16xf32>
    %c0_55 = arith.constant 0 : index
    %c0_56 = arith.constant 0 : index
    %c0_57 = arith.constant 0 : index
    %c0_58 = arith.constant 0 : index
    %230 = vector.load %arg5[%c0_55, %c0_56, %c0_57, %c0_58] : memref<1x1x8x16xf32, #tpu.memory_space<vmem>>, vector<1x1x8x16xf32>
    tpu.vector_store %arg5[%c0_55, %c0_56, %c0_57, %c0_58], %229 {strides = array<i32>} : memref<1x1x8x16xf32, #tpu.memory_space<vmem>>, vector<1x1x8x16xf32>,
    return
  }
  func.func @transform_0(%arg0: i32, %arg1: i32) -> (i32, i32, i32, i32) {
    %c0_i32 = arith.constant 0 : i32
    %c0_i32_0 = arith.constant 0 : i32
    %c0_i32_1 = arith.constant 0 : i32
    return %arg0, %c0_i32, %arg1, %c0_i32_0 : i32, i32, i32, i32
  }
  func.func @transform_1(%arg0: i32, %arg1: i32) -> (i32, i32, i32, i32) {
    %c1_i32 = arith.constant 1 : i32
    %0 = arith.muli %arg1, %c1_i32 : i32
    %c1_i32_0 = arith.constant 1 : i32
    %1 = arith.subi %0, %c1_i32_0 : i32
    %c0_i32 = arith.constant 0 : i32
    %2 = arith.maxsi %1, %c0_i32 : i32
    %c0_i32_1 = arith.constant 0 : i32
    %c0_i32_2 = arith.constant 0 : i32
    %c0_i32_3 = arith.constant 0 : i32
    return %arg0, %c0_i32_1, %2, %c0_i32_2 : i32, i32, i32, i32
  }
  func.func @transform_2(%arg0: i32, %arg1: i32) -> (i32, i32, i32, i32) {
    %c1_i32 = arith.constant 1 : i32
    %0 = arith.addi %arg1, %c1_i32 : i32
    %c1_i32_0 = arith.constant 1 : i32
    %1 = arith.muli %0, %c1_i32_0 : i32
    %c1_i32_1 = arith.constant 1 : i32
    %2 = arith.minsi %1, %c1_i32_1 : i32
    %c0_i32 = arith.constant 0 : i32
    %c0_i32_2 = arith.constant 0 : i32
    %c0_i32_3 = arith.constant 0 : i32
    return %arg0, %c0_i32, %2, %c0_i32_2 : i32, i32, i32, i32
  }
  func.func @transform_3(%arg0: i32, %arg1: i32) -> (i32, i32, i32, i32) {
    %c0_i32 = arith.constant 0 : i32
    %c0_i32_0 = arith.constant 0 : i32
    %c0_i32_1 = arith.constant 0 : i32
    return %arg0, %c0_i32, %arg1, %c0_i32_0 : i32, i32, i32, i32
  }
}

</mosaic_0001>

<llo_original>
// kernel: tpu_custom_call.1
$region0: #{tpu_custom_call.1}
  #allocation0 [shape = 'u32[]', space=smem, size = 0x4, offset = 0x4, fixed_abs, tag = 'smem constant byte address 0x4 - core index']
  #allocation1 [shape = 'u32[72,128]{1,0:T(1,128)}', space=vmem, size = 0x9000, scoped, tag = 'internal scratch']
  %s0 = inlined_call_operand.hbm [shape: f32[2,3,16,16], index: 0, kind: input, shape index: {}]
  %s1 = inlined_call_operand.hbm [shape: f32[2,3,16,16], index: 1, kind: input, shape index: {}]
  %s2 = inlined_call_operand.hbm [shape: f32[2,3,16,16], index: 2, kind: input, shape index: {}]
  %s3 = inlined_call_operand.hbm [shape: f32[2,1,16,16], index: 3, kind: output, shape index: {}]
  %s4 = sld [smem:[#allocation0]]
  $region57: #{tpu_custom_call.1} parent=0
    _
  %s6 = ssub.s32 1, %s4
  %s7 = scalar_select 0, %s6, %s4
  $region1: #{tpu_custom_call.1} parent=0
    #allocation2 [shape = 'u8[24576]{0}', space=vmem, size = 0x6000, scoped, tag = 'input window, operand 0']
    #allocation3 [shape = 's32[2]{0}', space=sflag, size = 0x8, scoped, tag = 'scoped memory for tpu_custom_call.1']
    #allocation4 [shape = 's32[2]{0}', space=sflag, size = 0x8, scoped, tag = 'scoped memory for tpu_custom_call.1']
    #allocation5 [shape = 'u8[24576]{0}', space=vmem, size = 0x6000, scoped, tag = 'input window, operand 1']
    #allocation6 [shape = 's32[2]{0}', space=sflag, size = 0x8, scoped, tag = 'scoped memory for tpu_custom_call.1']
    #allocation7 [shape = 'u8[24576]{0}', space=vmem, size = 0x6000, scoped, tag = 'input window, operand 2']
    #allocation8 [shape = 'u8[8192]{0}', space=vmem, size = 0x2000, scoped, tag = 'output window, operand 0']
    %8 = vsyncpa [#allocation3], 0
    %s9 = scalar_lea.sflag [#allocation3], 1
    %10 = vsyncpa %s9, 0
    %11 = vsyncpa [#allocation6], 0
    %s12 = scalar_lea.sflag [#allocation6], 1
    %13 = vsyncpa %s12, 0
    %14 = vsyncpa [#allocation4], 0
    %s15 = scalar_lea.sflag [#allocation4], 1
    %16 = vsyncpa %s15, 0
    loop: start=0, step=1, limit=6
    $region2: #{tpu_custom_call.1} parent=1 // loop_pre_header
      _
    $region3: #{tpu_custom_call.1} parent=1 // loop_header
      %s18 = sphi 0, %s22
      %p19 = scmp.ge.s32.totalorder %s18, 6
      %s25 = sphi 0, %s37
      %s26 = sphi 0, %s33
      %s27 = sphi 0, %s25
      %s28 = sphi 0, %s26
      %s29 = sphi 0, %s27
      %s30 = sphi 0, %s28
      %s42 = sphi 0, %s44
      %s45 = sphi 0, %s42
      %s46 = sphi 0, %s45
      %s62 = sphi 0, %s46
      %s76 = sphi 0, %s78
      %s79 = sphi 0, %s76
      %s80 = sphi 0, %s79
      %s96 = sphi 0, %s80
      %s110 = sphi 0, %s112
      %s113 = sphi 0, %s110
      %s114 = sphi 0, %s113
      %s130 = sphi 0, %s114
      %s138 = sphi 0, %s140
      %s141 = sphi 0, %s138
      %s142 = sphi 0, %s141
      %s158 = sphi 0, %s142
    $region4: #{tpu_custom_call.1} parent=1 // loop_header_branch
      %21 = sbr.rel (%p19) target = $region8
    $region5: #{tpu_custom_call.1} parent=1 // loop_body
      %s23 = ssub.s32 %s18, 1
      %s24 = ssub.s32 %s18, 2
      %s31 = sadd.s32 1, %s26
      %p32 = scmp.ge.s32.totalorder %s31, 2
      %s33 = scalar_select %p32, 0, %s31
      %s34 = sadd.s32 1, %s25
      %s35 = scalar_select %p32, %s34, %s25
      %p36 = scmp.ge.s32.totalorder %s35, 2
      %s37 = scalar_select %p36, 0, %s35
      %s38 = ssub.s32 %s25, %s37
      %s39 = ssub.s32 %s26, %s33
      %s40 = sor.u32 %s38, %s39
      %p41 = scmp.eq.s32.totalorder %s40, 0
      %s43 = sadd.s32 %s42, 1
      %s44 = scalar_select %p41, %s42, %s43
      %p47 = pneg %p41
      %p48 = scmp.eq.s32.totalorder %s18, 3
      %p49 = por %p47, %p48
      %p50 = scmp.ne.s32.totalorder %s42, %s45
      %p51 = scmp.eq.s32.totalorder %s18, 0
      %p52 = por %p50, %p51
      %p53 = scmp.ne.s32.totalorder %s42, %s45
      %p54 = scmp.eq.s32.totalorder %s23, 3
      %p55 = por %p53, %p54
      %p56 = scmp.ne.s32.totalorder %s45, %s46
      %p57 = scmp.eq.s32.totalorder %s23, 0
      %p58 = por %p56, %p57
      %p59 = scmp.ne.s32.totalorder %s45, %s46
      %p60 = scmp.eq.s32.totalorder %s24, 3
      %p61 = por %p59, %p60
      %p63 = scmp.ne.s32.totalorder %s46, %s62
      %p64 = scmp.eq.s32.totalorder %s24, 0
      %p65 = por %p63, %p64
      %s66 = ssub.s32 %s26, 1
      %p67 = scmp.gt.s32.totalorder %s66, 0
      %s68 = scalar_select %p67, %s66, 0
      %s69 = ssub.s32 %s33, 1
      %p70 = scmp.gt.s32.totalorder %s69, 0
      %s71 = scalar_select %p70, %s69, 0
      %s72 = ssub.s32 %s25, %s37
      %s73 = ssub.s32 %s68, %s71
      %s74 = sor.u32 %s72, %s73
      %p75 = scmp.eq.s32.totalorder %s74, 0
      %s77 = sadd.s32 %s76, 1
      %s78 = scalar_select %p75, %s76, %s77
      %p81 = pneg %p75
      %p82 = scmp.eq.s32.totalorder %s18, 3
      %p83 = por %p81, %p82
      %p84 = scmp.ne.s32.totalorder %s76, %s79
      %p85 = scmp.eq.s32.totalorder %s18, 0
      %p86 = por %p84, %p85
      %p87 = scmp.ne.s32.totalorder %s76, %s79
      %p88 = scmp.eq.s32.totalorder %s23, 3
      %p89 = por %p87, %p88
      %p90 = scmp.ne.s32.totalorder %s79, %s80
      %p91 = scmp.eq.s32.totalorder %s23, 0
      %p92 = por %p90, %p91
      %p93 = scmp.ne.s32.totalorder %s79, %s80
      %p94 = scmp.eq.s32.totalorder %s24, 3
      %p95 = por %p93, %p94
      %p97 = scmp.ne.s32.totalorder %s80, %s96
      %p98 = scmp.eq.s32.totalorder %s24, 0
      %p99 = por %p97, %p98
      %s100 = sadd.s32 %s26, 1
      %p101 = scmp.lt.s32.totalorder %s100, 1
      %s102 = scalar_select %p101, %s100, 1
      %s103 = sadd.s32 %s33, 1
      %p104 = scmp.lt.s32.totalorder %s103, 1
      %s105 = scalar_select %p104, %s103, 1
      %s106 = ssub.s32 %s25, %s37
      %s107 = ssub.s32 %s102, %s105
      %s108 = sor.u32 %s106, %s107
      %p109 = scmp.eq.s32.totalorder %s108, 0
      %s111 = sadd.s32 %s110, 1
      %s112 = scalar_select %p109, %s110, %s111
      %p115 = pneg %p109
      %p116 = scmp.eq.s32.totalorder %s18, 3
      %p117 = por %p115, %p116
      %p118 = scmp.ne.s32.totalorder %s110, %s113
      %p119 = scmp.eq.s32.totalorder %s18, 0
      %p120 = por %p118, %p119
      %p121 = scmp.ne.s32.totalorder %s110, %s113
      %p122 = scmp.eq.s32.totalorder %s23, 3
      %p123 = por %p121, %p122
      %p124 = scmp.ne.s32.totalorder %s113, %s114
      %p125 = scmp.eq.s32.totalorder %s23, 0
      %p126 = por %p124, %p125
      %p127 = scmp.ne.s32.totalorder %s113, %s114
      %p128 = scmp.eq.s32.totalorder %s24, 3
      %p129 = por %p127, %p128
      %p131 = scmp.ne.s32.totalorder %s114, %s130
      %p132 = scmp.eq.s32.totalorder %s24, 0
      %p133 = por %p131, %p132
      %s134 = ssub.s32 %s25, %s37
      %s135 = ssub.s32 %s26, %s33
      %s136 = sor.u32 %s134, %s135
      %p137 = scmp.eq.s32.totalorder %s136, 0
      %s139 = sadd.s32 %s138, 1
      %s140 = scalar_select %p137, %s138, %s139
      %p143 = pneg %p137
      %p144 = scmp.eq.s32.totalorder %s18, 3
      %p145 = por %p143, %p144
      %p146 = scmp.ne.s32.totalorder %s138, %s141
      %p147 = scmp.eq.s32.totalorder %s18, 0
      %p148 = por %p146, %p147
      %p149 = scmp.ne.s32.totalorder %s138, %s141
      %p150 = scmp.eq.s32.totalorder %s23, 3
      %p151 = por %p149, %p150
      %p152 = scmp.ne.s32.totalorder %s141, %s142
      %p153 = scmp.eq.s32.totalorder %s23, 0
      %p154 = por %p152, %p153
      %p155 = scmp.ne.s32.totalorder %s141, %s142
      %p156 = scmp.eq.s32.totalorder %s24, 3
      %p157 = por %p155, %p156
      %p159 = scmp.ne.s32.totalorder %s142, %s158
      %p160 = scmp.eq.s32.totalorder %s24, 0
      %p161 = por %p159, %p160
      %p162 = scmp.le.s32.totalorder 1, %s18
      %p163 = scmp.lt.s32.totalorder %s18, 5
      %p164 = pnand %p162, %p163
      %p165 = pneg %p164
      // Predicated region
      $region9: #{tpu_custom_call.1} parent=5 // pred_check
        _
      $region10: #{tpu_custom_call.1} parent=5 // pred_check_branch
        %167 = sbr.rel (%p164) target = $region12
      $region11: #{tpu_custom_call.1} parent=5 // pred_region
        %s168 = ssub.s32 %s18, 1
      $region12: #{tpu_custom_call.1} parent=5 // pred_fallthru
        _
      %p169 = scmp.lt.s32.totalorder %s18, 4
      // Predicated region
      $region13: #{tpu_custom_call.1} parent=5 // pred_check
        %p170 = pneg %p169
      $region14: #{tpu_custom_call.1} parent=5 // pred_check_branch
        %172 = sbr.rel (%p170) target = $region16
      $region15: #{tpu_custom_call.1} parent=5 // pred_region
        // Predicated region
        $region17: #{tpu_custom_call.1} parent=15 // pred_check
          %p173 = pneg %p52
        $region18: #{tpu_custom_call.1} parent=15 // pred_check_branch
          %175 = sbr.rel (%p173) target = $region20
        $region19: #{tpu_custom_call.1} parent=15 // pred_region
          %s176 = sand.u32 %s42, 1
          %s177 = scalar_lea.sflag [#allocation3], %s176
          %s178 = sand.u32 %s42, 1
          %s179 = smul.addr %s178, 24
          %s180 = scalar_lea.vmem [#allocation2], %s179
          %182 = vsyncadd %s177, 0
          %s183 = smul.addr %s25, 6
          %s184 = sadd.s32 %s26, %s183
          %s185 = smul.addr %s184, 8
          %s186 = scalar_lea.hbm %s0, %s185
          %s187 = sshll.u32 %s186, 4
          %s188 = int_to_ptr.hbm [resolvable:$true] %s187
          %s189 = sshll.u32 %s180, 4
          %s190 = int_to_ptr.vmem [resolvable:$true] %s189
          %195 = dma.hbm_to_vmem [thread:$0]  %s188, 384, %s190, %s177, 256, 128, 8
        $region20: #{tpu_custom_call.1} parent=15 // pred_fallthru
          _
        // Predicated region
        $region21: #{tpu_custom_call.1} parent=15 // pred_check
          %p196 = pneg %p86
        $region22: #{tpu_custom_call.1} parent=15 // pred_check_branch
          %198 = sbr.rel (%p196) target = $region24
        $region23: #{tpu_custom_call.1} parent=15 // pred_region
          %s199 = sand.u32 %s18, 1
          %s200 = scalar_lea.sflag [#allocation6], %s199
          %s201 = sand.u32 %s76, 1
          %s202 = smul.addr %s201, 24
          %s203 = scalar_lea.vmem [#allocation5], %s202
          %s204 = ssub.s32 %s26, 1
          %p205 = scmp.gt.s32.totalorder %s204, 0
          %s206 = scalar_select %p205, %s204, 0
          %208 = vsyncadd %s200, 0
          %s209 = smul.addr %s25, 6
          %s210 = sadd.s32 %s206, %s209
          %s211 = smul.addr %s210, 8
          %s212 = scalar_lea.hbm %s1, %s211
          %s213 = sshll.u32 %s212, 4
          %s214 = int_to_ptr.hbm [resolvable:$true] %s213
          %s215 = sshll.u32 %s203, 4
          %s216 = int_to_ptr.vmem [resolvable:$true] %s215
          %221 = dma.hbm_to_vmem [thread:$0]  %s214, 384, %s216, %s200, 256, 128, 8
        $region24: #{tpu_custom_call.1} parent=15 // pred_fallthru
          _
        // Predicated region
        $region25: #{tpu_custom_call.1} parent=15 // pred_check
          %p222 = pneg %p120
        $region26: #{tpu_custom_call.1} parent=15 // pred_check_branch
          %224 = sbr.rel (%p222) target = $region28
        $region27: #{tpu_custom_call.1} parent=15 // pred_region
          %s225 = sand.u32 %s18, 1
          %s226 = scalar_lea.sflag [#allocation6], %s225
          %s227 = sand.u32 %s110, 1
          %s228 = smul.addr %s227, 24
          %s229 = scalar_lea.vmem [#allocation7], %s228
          %s230 = sadd.s32 %s26, 1
          %p231 = scmp.lt.s32.totalorder %s230, 1
          %s232 = scalar_select %p231, %s230, 1
          %234 = vsyncadd %s226, 0
          %s235 = smul.addr %s25, 6
          %s236 = sadd.s32 %s232, %s235
          %s237 = smul.addr %s236, 8
          %s238 = scalar_lea.hbm %s2, %s237
          %s239 = sshll.u32 %s238, 4
          %s240 = int_to_ptr.hbm [resolvable:$true] %s239
          %s241 = sshll.u32 %s229, 4
          %s242 = int_to_ptr.vmem [resolvable:$true] %s241
          %247 = dma.hbm_to_vmem [thread:$0]  %s240, 384, %s242, %s226, 256, 128, 8
        $region28: #{tpu_custom_call.1} parent=15 // pred_fallthru
          _
      $region16: #{tpu_custom_call.1} parent=5 // pred_fallthru
        _
      %p248 = scmp.le.s32.totalorder 1, %s18
      %p249 = scmp.lt.s32.totalorder %s18, 5
      %p250 = pnand %p248, %p249
      %p251 = pneg %p250
      // Predicated region
      $region29: #{tpu_custom_call.1} parent=5 // pred_check
        _
      $region30: #{tpu_custom_call.1} parent=5 // pred_check_branch
        %253 = sbr.rel (%p250) target = $region32
      $region31: #{tpu_custom_call.1} parent=5 // pred_region
        %s254 = ssub.s32 %s18, 1
        %s255 = sand.u32 %s45, 1
        %s256 = scalar_lea.sflag [#allocation3], %s255
        %s257 = sand.u32 %s45, 1
        %s258 = smul.addr %s257, 24
        %s259 = scalar_lea.vmem [#allocation2], %s258
        // Predicated region
        $region33: #{tpu_custom_call.1} parent=31 // pred_check
          %p260 = pneg %p58
        $region34: #{tpu_custom_call.1} parent=31 // pred_check_branch
          %262 = sbr.rel (%p260) target = $region36
        $region35: #{tpu_custom_call.1} parent=31 // pred_region
          %264 = dma.done %s256, 384
        $region36: #{tpu_custom_call.1} parent=31 // pred_fallthru
          _
        %s265 = sand.u32 %s23, 1
        %s266 = scalar_lea.sflag [#allocation6], %s265
        %s267 = sand.u32 %s79, 1
        %s268 = smul.addr %s267, 24
        %s269 = scalar_lea.vmem [#allocation5], %s268
        // Predicated region
        $region37: #{tpu_custom_call.1} parent=31 // pred_check
          %p270 = pneg %p92
        $region38: #{tpu_custom_call.1} parent=31 // pred_check_branch
          %272 = sbr.rel (%p270) target = $region40
        $region39: #{tpu_custom_call.1} parent=31 // pred_region
          %274 = dma.done %s266, 384
        $region40: #{tpu_custom_call.1} parent=31 // pred_fallthru
          _
        %s275 = sand.u32 %s23, 1
        %s276 = scalar_lea.sflag [#allocation6], %s275
        %s277 = sand.u32 %s113, 1
        %s278 = smul.addr %s277, 24
        %s279 = scalar_lea.vmem [#allocation7], %s278
        // Predicated region
        $region41: #{tpu_custom_call.1} parent=31 // pred_check
          %p280 = pneg %p126
        $region42: #{tpu_custom_call.1} parent=31 // pred_check_branch
          %282 = sbr.rel (%p280) target = $region44
        $region43: #{tpu_custom_call.1} parent=31 // pred_region
          %284 = dma.done %s276, 384
        $region44: #{tpu_custom_call.1} parent=31 // pred_fallthru
          _
        %s285 = sand.u32 %s45, 1
        %s286 = scalar_lea.sflag [#allocation3], %s285
        %s287 = sand.u32 %s45, 1
        %s288 = smul.addr %s287, 24
        %s289 = scalar_lea.vmem [#allocation2], %s288
        %p290 = pneg %p58
        %p291 = pneg %p55
        %s292 = sand.u32 %s23, 1
        %s293 = scalar_lea.sflag [#allocation6], %s292
        %s294 = sand.u32 %s79, 1
        %s295 = smul.addr %s294, 24
        %s296 = scalar_lea.vmem [#allocation5], %s295
        %p297 = pneg %p92
        %p298 = pneg %p89
        %s299 = sand.u32 %s23, 1
        %s300 = scalar_lea.sflag [#allocation6], %s299
        %s301 = sand.u32 %s113, 1
        %s302 = smul.addr %s301, 24
        %s303 = scalar_lea.vmem [#allocation7], %s302
        %p304 = pneg %p126
        %p305 = pneg %p123
        %p306 = pneg %p154
        %p307 = pneg %p151
        %s308 = sand.u32 %s141, 1
        %s309 = scalar_lea.sflag [#allocation4], %s308
        %s310 = sand.u32 %s141, 1
        %s311 = smul.addr %s310, 8
        %s312 = scalar_lea.vmem [#allocation8], %s311
        %s313 = ssub.s32 %s28, 1
        %p314 = scmp.gt.s32.totalorder %s313, 0
        %s315 = scalar_select %p314, %s313, 0
        %s316 = sadd.s32 %s28, 1
        %p317 = scmp.lt.s32.totalorder %s316, 1
        %s318 = scalar_select %p317, %s316, 1
        %s319 = smul.u32 %s28, 8
        %s320 = ssub.s32 %s319, 8
        %v321 = vlaneseq
        %v322 = vshrl.u32 %v321, 7
        %v323 = vadd.s32 %v322, 8
        %v324 = vadd.s32 %v322, 16
        %v325 = vstv %s320
        %v326 = vadd.s32 %v325, %v322
        %v327 = vadd.s32 %v325, %v323
        %v328 = vadd.s32 %v325, %v324
        %vm329 = vcmp.lt.s32.totalorder %v326, 0
        %vm330 = vcmp.lt.s32.totalorder %v327, 0
        %vm331 = vcmp.lt.s32.totalorder %v328, 0
        %vm332 = vcmp.ge.s32.totalorder %v326, 16
        %vm333 = vcmp.ge.s32.totalorder %v327, 16
        %vm334 = vcmp.ge.s32.totalorder %v328, 16
        %s335 = ssub.s32 %s319, 2
        %v336 = vstv %s335
        %v337 = vadd.s32 %v336, %v322
        %v338 = vadd.s32 %v336, %v323
        %vm339 = vcmp.ge.s32.totalorder %v337, 0
        %vm340 = vcmp.ge.s32.totalorder %v338, 0
        %vm341 = vcmp.lt.s32.totalorder %v337, 16
        %vm342 = vcmp.lt.s32.totalorder %v338, 16
        %vm343 = vmand %vm339, %vm341
        %vm344 = vmand %vm340, %vm342
        %v345 = vld [vmem:[%s259] sm:$0xff]
        %v346 = vld [vmem:[%s269] sm:$0xff]
        %v347 = vld [vmem:[%s279] sm:$0xff]
        %v348 = vperm.slane %v345, 0
        %v349 = vsel %vm329, %v348, %v346
        %v350 = vsel %vm330, %v348, %v345
        %v351 = vsel %vm331, %v348, %v347
        %v352 = vperm.slane %v345, 7
        %v353 = vsel %vm332, %v352, %v349
        %v354 = vsel %vm333, %v352, %v350
        %v355 = vsel %vm334, %v352, %v351
        %v356 = vmul.f32 %v353, 255.0
        %v357 = vmul.f32 %v354, 255.0
        %v358 = vmul.f32 %v355, 255.0
        %v359 = vfloor.f32 %v356
        %v360 = vfloor.f32 %v357
        %v361 = vfloor.f32 %v358
        %365 = vrot.lane.b32.xlu0 %v359, 1
        %v366 = vpop.permute.xlu0 %365
        %367 = vrot.lane.b32.xlu0 %v360, 1
        %v368 = vpop.permute.xlu0 %367
        %369 = vrot.lane.b32.xlu0 %v361, 1
        %v370 = vpop.permute.xlu0 %369
        %374 = vrot.lane.b32.xlu0 %v359, 2
        %v375 = vpop.permute.xlu0 %374
        %376 = vrot.lane.b32.xlu0 %v360, 2
        %v377 = vpop.permute.xlu0 %376
        %378 = vrot.lane.b32.xlu0 %v361, 2
        %v379 = vpop.permute.xlu0 %378
        %vm383 = vcmask 7168
        %v384 = vsel %vm383, %v359, %v366
        %v385 = vsel %vm383, %v360, %v368
        %v386 = vsel %vm383, %v361, %v370
        %vm387 = vcmask 138240
        %v388 = vsel %vm387, %v384, %v375
        %v389 = vsel %vm387, %v385, %v377
        %v390 = vsel %vm387, %v386, %v379
        %394 = vrot.lane.b32.xlu0 %v388, 2
        %v395 = vpop.permute.xlu0 %394
        %396 = vrot.lane.b32.xlu0 %v389, 2
        %v397 = vpop.permute.xlu0 %396
        %398 = vrot.lane.b32.xlu0 %v390, 2
        %v399 = vpop.permute.xlu0 %398
        %v403 = vsub.f32 %v388, %v395
        %v404 = vsub.f32 %v389, %v397
        %v405 = vsub.f32 %v390, %v399
        %v406 = vmul.f32 %v388, 2.0
        %v407 = vmul.f32 %v389, 2.0
        %v408 = vmul.f32 %v390, 2.0
        %412 = vrot.lane.b32.xlu0 %v406, 127
        %v413 = vpop.permute.xlu0 %412
        %414 = vrot.lane.b32.xlu0 %v407, 127
        %v415 = vpop.permute.xlu0 %414
        %416 = vrot.lane.b32.xlu0 %v408, 127
        %v417 = vpop.permute.xlu0 %416
        %v421 = vadd.f32 %v388, %v413
        %v422 = vadd.f32 %v389, %v415
        %v423 = vadd.f32 %v390, %v417
        %424 = vrot.lane.b32.xlu0 %v388, 126
        %v425 = vpop.permute.xlu0 %424
        %426 = vrot.lane.b32.xlu0 %v389, 126
        %v427 = vpop.permute.xlu0 %426
        %428 = vrot.lane.b32.xlu0 %v390, 126
        %v429 = vpop.permute.xlu0 %428
        %v433 = vadd.f32 %v421, %v425
        %v434 = vadd.f32 %v422, %v427
        %v435 = vadd.f32 %v423, %v429
        %v436 = vmul.f32 %v403, 2.0
        %v437 = vmul.f32 %v404, 2.0
        %v438 = vmul.f32 %v405, 2.0
        %vm442 = vcmask 1046528
        %v443 = vrot.slane %v436, 1
        %v444 = vrot.slane %v437, 1
        %v445 = vsel %vm442, %v443, %v444
        %v446 = vrot.slane %v438, 1
        %v447 = vsel %vm442, %v444, %v446
        %v451 = vadd.f32 %v403, %v445
        %v452 = vadd.f32 %v404, %v447
        %v453 = vadd.f32 %v405, %v446
        %vm457 = vcmask 1045504
        %v458 = vrot.slane %v403, 2
        %v459 = vrot.slane %v404, 2
        %v460 = vsel %vm457, %v458, %v459
        %v461 = vrot.slane %v405, 2
        %v462 = vsel %vm457, %v459, %v461
        %v466 = vadd.f32 %v451, %v460
        %v467 = vadd.f32 %v452, %v462
        %v468 = vadd.f32 %v453, %v461
        %vm472 = vcmask 1041408
        %v473 = vrot.slane %v433, 6
        %v474 = vrot.slane %v434, 6
        %v475 = vsel %vm472, %v473, %v474
        %v476 = vrot.slane %v435, 6
        %v477 = vsel %vm472, %v474, %v476
        %v481 = vsub.f32 %v433, %v473
        %v482 = vsub.f32 %v434, %v475
        %v483 = vsub.f32 %v435, %v477
        %v484 = vand.u32 2147483647, %v466
        %v485 = vand.u32 2147483647, %v467
        %v486 = vand.u32 2147483647, %v468
        %v487 = vand.u32 2147483647, %v481
        %v488 = vand.u32 2147483647, %v482
        %v489 = vand.u32 2147483647, %v483
        %v493 = vrot.slane %v487, 2
        %v494 = vrot.slane %v488, 2
        %v495 = vsel %vm457, %v493, %v494
        %v496 = vrot.slane %v489, 2
        %v497 = vsel %vm457, %v494, %v496
        %498 = vrot.lane.b32.xlu0 %v495, 2
        %v499 = vpop.permute.xlu0 %498
        %500 = vrot.lane.b32.xlu0 %v497, 2
        %v501 = vpop.permute.xlu0 %500
        %502 = vrot.lane.b32.xlu0 %v496, 2
        %v503 = vpop.permute.xlu0 %502
        %v507 = vadd.f32 %v484, %v499
        %v508 = vadd.f32 %v485, %v501
        %v509 = vadd.f32 %v486, %v503
        %s510 = scalar_lea.vmem %s259, 8 [#allocation2]
        %v511 = vld [vmem:[%s510] sm:$0xff]
        %s512 = scalar_lea.vmem %s269, 8 [#allocation5]
        %v513 = vld [vmem:[%s512] sm:$0xff]
        %s514 = scalar_lea.vmem %s279, 8 [#allocation7]
        %v515 = vld [vmem:[%s514] sm:$0xff]
        %v516 = vperm.slane %v511, 0
        %v517 = vsel %vm329, %v516, %v513
        %v518 = vsel %vm330, %v516, %v511
        %v519 = vsel %vm331, %v516, %v515
        %v520 = vperm.slane %v511, 7
        %v521 = vsel %vm332, %v520, %v517
        %v522 = vsel %vm333, %v520, %v518
        %v523 = vsel %vm334, %v520, %v519
        %v524 = vmul.f32 %v521, 255.0
        %v525 = vmul.f32 %v522, 255.0
        %v526 = vmul.f32 %v523, 255.0
        %v527 = vfloor.f32 %v524
        %v528 = vfloor.f32 %v525
        %v529 = vfloor.f32 %v526
        %533 = vrot.lane.b32.xlu0 %v527, 1
        %v534 = vpop.permute.xlu0 %533
        %535 = vrot.lane.b32.xlu0 %v528, 1
        %v536 = vpop.permute.xlu0 %535
        %537 = vrot.lane.b32.xlu0 %v529, 1
        %v538 = vpop.permute.xlu0 %537
        %542 = vrot.lane.b32.xlu0 %v527, 2
        %v543 = vpop.permute.xlu0 %542
        %544 = vrot.lane.b32.xlu0 %v528, 2
        %v545 = vpop.permute.xlu0 %544
        %546 = vrot.lane.b32.xlu0 %v529, 2
        %v547 = vpop.permute.xlu0 %546
        %v551 = vsel %vm383, %v527, %v534
        %v552 = vsel %vm383, %v528, %v536
        %v553 = vsel %vm383, %v529, %v538
        %v554 = vsel %vm387, %v551, %v543
        %v555 = vsel %vm387, %v552, %v545
        %v556 = vsel %vm387, %v553, %v547
        %560 = vrot.lane.b32.xlu0 %v554, 2
        %v561 = vpop.permute.xlu0 %560
        %562 = vrot.lane.b32.xlu0 %v555, 2
        %v563 = vpop.permute.xlu0 %562
        %564 = vrot.lane.b32.xlu0 %v556, 2
        %v565 = vpop.permute.xlu0 %564
        %v569 = vsub.f32 %v554, %v561
        %v570 = vsub.f32 %v555, %v563
        %v571 = vsub.f32 %v556, %v565
        %v572 = vmul.f32 %v554, 2.0
        %v573 = vmul.f32 %v555, 2.0
        %v574 = vmul.f32 %v556, 2.0
        %578 = vrot.lane.b32.xlu0 %v572, 127
        %v579 = vpop.permute.xlu0 %578
        %580 = vrot.lane.b32.xlu0 %v573, 127
        %v581 = vpop.permute.xlu0 %580
        %582 = vrot.lane.b32.xlu0 %v574, 127
        %v583 = vpop.permute.xlu0 %582
        %v587 = vadd.f32 %v554, %v579
        %v588 = vadd.f32 %v555, %v581
        %v589 = vadd.f32 %v556, %v583
        %590 = vrot.lane.b32.xlu0 %v554, 126
        %v591 = vpop.permute.xlu0 %590
        %592 = vrot.lane.b32.xlu0 %v555, 126
        %v593 = vpop.permute.xlu0 %592
        %594 = vrot.lane.b32.xlu0 %v556, 126
        %v595 = vpop.permute.xlu0 %594
        %v599 = vadd.f32 %v587, %v591
        %v600 = vadd.f32 %v588, %v593
        %v601 = vadd.f32 %v589, %v595
        %v602 = vmul.f32 %v569, 2.0
        %v603 = vmul.f32 %v570, 2.0
        %v604 = vmul.f32 %v571, 2.0
        %v608 = vrot.slane %v602, 1
        %v609 = vrot.slane %v603, 1
        %v610 = vsel %vm442, %v608, %v609
        %v611 = vrot.slane %v604, 1
        %v612 = vsel %vm442, %v609, %v611
        %v616 = vadd.f32 %v569, %v610
        %v617 = vadd.f32 %v570, %v612
        %v618 = vadd.f32 %v571, %v611
        %v622 = vrot.slane %v569, 2
        %v623 = vrot.slane %v570, 2
        %v624 = vsel %vm457, %v622, %v623
        %v625 = vrot.slane %v571, 2
        %v626 = vsel %vm457, %v623, %v625
        %v630 = vadd.f32 %v616, %v624
        %v631 = vadd.f32 %v617, %v626
        %v632 = vadd.f32 %v618, %v625
        %v636 = vrot.slane %v599, 6
        %v637 = vrot.slane %v600, 6
        %v638 = vsel %vm472, %v636, %v637
        %v639 = vrot.slane %v601, 6
        %v640 = vsel %vm472, %v637, %v639
        %v644 = vsub.f32 %v599, %v636
        %v645 = vsub.f32 %v600, %v638
        %v646 = vsub.f32 %v601, %v640
        %v647 = vand.u32 2147483647, %v630
        %v648 = vand.u32 2147483647, %v631
        %v649 = vand.u32 2147483647, %v632
        %v650 = vand.u32 2147483647, %v644
        %v651 = vand.u32 2147483647, %v645
        %v652 = vand.u32 2147483647, %v646
        %v656 = vrot.slane %v650, 2
        %v657 = vrot.slane %v651, 2
        %v658 = vsel %vm457, %v656, %v657
        %v659 = vrot.slane %v652, 2
        %v660 = vsel %vm457, %v657, %v659
        %661 = vrot.lane.b32.xlu0 %v658, 2
        %v662 = vpop.permute.xlu0 %661
        %663 = vrot.lane.b32.xlu0 %v660, 2
        %v664 = vpop.permute.xlu0 %663
        %665 = vrot.lane.b32.xlu0 %v659, 2
        %v666 = vpop.permute.xlu0 %665
        %v670 = vadd.f32 %v647, %v662
        %v671 = vadd.f32 %v648, %v664
        %v672 = vadd.f32 %v649, %v666
        %vm673 = vcmp.gt.f32.partialorder %v670, %v507
        %vm674 = vcmp.gt.f32.partialorder %v671, %v508
        %vm675 = vcmp.gt.f32.partialorder %v672, %v509
        %v676 = vsel %vm673, %v670, %v507
        %v677 = vsel %vm674, %v671, %v508
        %v678 = vsel %vm675, %v672, %v509
        %v679 = vsel %vm673, %v630, %v466
        %v680 = vsel %vm674, %v631, %v467
        %v684 = vrot.slane %v644, 2
        %v685 = vrot.slane %v645, 2
        %v686 = vsel %vm457, %v684, %v685
        %v687 = vrot.slane %v646, 2
        %v688 = vsel %vm457, %v685, %v687
        %689 = vrot.lane.b32.xlu0 %v686, 2
        %v690 = vpop.permute.xlu0 %689
        %691 = vrot.lane.b32.xlu0 %v688, 2
        %v692 = vpop.permute.xlu0 %691
        %v698 = vrot.slane %v481, 2
        %v699 = vrot.slane %v482, 2
        %v700 = vsel %vm457, %v698, %v699
        %v701 = vrot.slane %v483, 2
        %v702 = vsel %vm457, %v699, %v701
        %703 = vrot.lane.b32.xlu0 %v700, 2
        %v704 = vpop.permute.xlu0 %703
        %705 = vrot.lane.b32.xlu0 %v702, 2
        %v706 = vpop.permute.xlu0 %705
        %v709 = vsel %vm673, %v690, %v704
        %v710 = vsel %vm674, %v692, %v706
        %s711 = scalar_lea.vmem %s259, 16 [#allocation2]
        %v712 = vld [vmem:[%s711] sm:$0xff]
        %s713 = scalar_lea.vmem %s269, 16 [#allocation5]
        %v714 = vld [vmem:[%s713] sm:$0xff]
        %s715 = scalar_lea.vmem %s279, 16 [#allocation7]
        %v716 = vld [vmem:[%s715] sm:$0xff]
        %v717 = vperm.slane %v712, 0
        %v718 = vsel %vm329, %v717, %v714
        %v719 = vsel %vm330, %v717, %v712
        %v720 = vsel %vm331, %v717, %v716
        %v721 = vperm.slane %v712, 7
        %v722 = vsel %vm332, %v721, %v718
        %v723 = vsel %vm333, %v721, %v719
        %v724 = vsel %vm334, %v721, %v720
        %v725 = vmul.f32 %v722, 255.0
        %v726 = vmul.f32 %v723, 255.0
        %v727 = vmul.f32 %v724, 255.0
        %v728 = vfloor.f32 %v725
        %v729 = vfloor.f32 %v726
        %v730 = vfloor.f32 %v727
        %734 = vrot.lane.b32.xlu0 %v728, 1
        %v735 = vpop.permute.xlu0 %734
        %736 = vrot.lane.b32.xlu0 %v729, 1
        %v737 = vpop.permute.xlu0 %736
        %738 = vrot.lane.b32.xlu0 %v730, 1
        %v739 = vpop.permute.xlu0 %738
        %743 = vrot.lane.b32.xlu0 %v728, 2
        %v744 = vpop.permute.xlu0 %743
        %745 = vrot.lane.b32.xlu0 %v729, 2
        %v746 = vpop.permute.xlu0 %745
        %747 = vrot.lane.b32.xlu0 %v730, 2
        %v748 = vpop.permute.xlu0 %747
        %v752 = vsel %vm383, %v728, %v735
        %v753 = vsel %vm383, %v729, %v737
        %v754 = vsel %vm383, %v730, %v739
        %v755 = vsel %vm387, %v752, %v744
        %v756 = vsel %vm387, %v753, %v746
        %v757 = vsel %vm387, %v754, %v748
        %761 = vrot.lane.b32.xlu0 %v755, 2
        %v762 = vpop.permute.xlu0 %761
        %763 = vrot.lane.b32.xlu0 %v756, 2
        %v764 = vpop.permute.xlu0 %763
        %765 = vrot.lane.b32.xlu0 %v757, 2
        %v766 = vpop.permute.xlu0 %765
        %v770 = vsub.f32 %v755, %v762
        %v771 = vsub.f32 %v756, %v764
        %v772 = vsub.f32 %v757, %v766
        %v773 = vmul.f32 %v755, 2.0
        %v774 = vmul.f32 %v756, 2.0
        %v775 = vmul.f32 %v757, 2.0
        %779 = vrot.lane.b32.xlu0 %v773, 127
        %v780 = vpop.permute.xlu0 %779
        %781 = vrot.lane.b32.xlu0 %v774, 127
        %v782 = vpop.permute.xlu0 %781
        %783 = vrot.lane.b32.xlu0 %v775, 127
        %v784 = vpop.permute.xlu0 %783
        %v788 = vadd.f32 %v755, %v780
        %v789 = vadd.f32 %v756, %v782
        %v790 = vadd.f32 %v757, %v784
        %791 = vrot.lane.b32.xlu0 %v755, 126
        %v792 = vpop.permute.xlu0 %791
        %793 = vrot.lane.b32.xlu0 %v756, 126
        %v794 = vpop.permute.xlu0 %793
        %795 = vrot.lane.b32.xlu0 %v757, 126
        %v796 = vpop.permute.xlu0 %795
        %v800 = vadd.f32 %v788, %v792
        %v801 = vadd.f32 %v789, %v794
        %v802 = vadd.f32 %v790, %v796
        %v803 = vmul.f32 %v770, 2.0
        %v804 = vmul.f32 %v771, 2.0
        %v805 = vmul.f32 %v772, 2.0
        %v809 = vrot.slane %v803, 1
        %v810 = vrot.slane %v804, 1
        %v811 = vsel %vm442, %v809, %v810
        %v812 = vrot.slane %v805, 1
        %v813 = vsel %vm442, %v810, %v812
        %v817 = vadd.f32 %v770, %v811
        %v818 = vadd.f32 %v771, %v813
        %v819 = vadd.f32 %v772, %v812
        %v823 = vrot.slane %v770, 2
        %v824 = vrot.slane %v771, 2
        %v825 = vsel %vm457, %v823, %v824
        %v826 = vrot.slane %v772, 2
        %v827 = vsel %vm457, %v824, %v826
        %v831 = vadd.f32 %v817, %v825
        %v832 = vadd.f32 %v818, %v827
        %v833 = vadd.f32 %v819, %v826
        %v837 = vrot.slane %v800, 6
        %v838 = vrot.slane %v801, 6
        %v839 = vsel %vm472, %v837, %v838
        %v840 = vrot.slane %v802, 6
        %v841 = vsel %vm472, %v838, %v840
        %v845 = vsub.f32 %v800, %v837
        %v846 = vsub.f32 %v801, %v839
        %v847 = vsub.f32 %v802, %v841
        %v848 = vand.u32 2147483647, %v831
        %v849 = vand.u32 2147483647, %v832
        %v850 = vand.u32 2147483647, %v833
        %v851 = vand.u32 2147483647, %v845
        %v852 = vand.u32 2147483647, %v846
        %v853 = vand.u32 2147483647, %v847
        %v857 = vrot.slane %v851, 2
        %v858 = vrot.slane %v852, 2
        %v859 = vsel %vm457, %v857, %v858
        %v860 = vrot.slane %v853, 2
        %v861 = vsel %vm457, %v858, %v860
        %862 = vrot.lane.b32.xlu0 %v859, 2
        %v863 = vpop.permute.xlu0 %862
        %864 = vrot.lane.b32.xlu0 %v861, 2
        %v865 = vpop.permute.xlu0 %864
        %866 = vrot.lane.b32.xlu0 %v860, 2
        %v867 = vpop.permute.xlu0 %866
        %v871 = vadd.f32 %v848, %v863
        %v872 = vadd.f32 %v849, %v865
        %v873 = vadd.f32 %v850, %v867
        %vm874 = vcmp.gt.f32.partialorder %v871, %v676
        %vm875 = vcmp.gt.f32.partialorder %v872, %v677
        %vm876 = vcmp.gt.f32.partialorder %v873, %v678
        %v877 = vsel %vm874, %v871, %v676
        %v878 = vsel %vm875, %v872, %v677
        %v879 = vsel %vm876, %v873, %v678
        %v880 = vsel %vm874, %v831, %v679
        %v881 = vsel %vm875, %v832, %v680
        %v885 = vrot.slane %v845, 2
        %v886 = vrot.slane %v846, 2
        %v887 = vsel %vm457, %v885, %v886
        %v888 = vrot.slane %v847, 2
        %v889 = vsel %vm457, %v886, %v888
        %890 = vrot.lane.b32.xlu0 %v887, 2
        %v891 = vpop.permute.xlu0 %890
        %892 = vrot.lane.b32.xlu0 %v889, 2
        %v893 = vpop.permute.xlu0 %892
        %v896 = vsel %vm874, %v891, %v709
        %v897 = vsel %vm875, %v893, %v710
        %vm901 = vcmask 1042432
        %v902 = vrot.slane %v877, 5
        %v903 = vrot.slane %v878, 5
        %v904 = vsel %vm901, %v902, %v903
        %v905 = vrot.slane %v879, 5
        %v906 = vsel %vm901, %v903, %v905
        %907 = vrot.lane.b32.xlu0 %v904, 126
        %v908 = vpop.permute.xlu0 %907
        %909 = vrot.lane.b32.xlu0 %v906, 126
        %v910 = vpop.permute.xlu0 %909
        %v913 = vsel %vm343, %v908, 0.0
        %v914 = vsel %vm344, %v910, 0.0
        %917 = vrot.lane.b32.xlu0 %v913, 1
        %v918 = vpop.permute.xlu0 %917
        %919 = vrot.lane.b32.xlu0 %v914, 1
        %v920 = vpop.permute.xlu0 %919
        %v923 = vsel %vm383, 0.0, %v918
        %v924 = vsel %vm383, 0.0, %v920
        %v925 = vsel %vm387, %v923, 0.0
        %v926 = vsel %vm387, %v924, 0.0
        %v927 = vand.u32 2147483647, %v880
        %v928 = vand.u32 2147483647, %v881
        %v929 = vand.u32 2147483647, %v896
        %v930 = vand.u32 2147483647, %v897
        %v931 = vmul.f32 %v927, 0.41421357
        %v932 = vmul.f32 %v928, 0.41421357
        %vm933 = vcmp.le.f32.partialorder %v929, %v931
        %vm934 = vcmp.le.f32.partialorder %v930, %v932
        %v935 = vmul.f32 %v927, 2.4142137
        %v936 = vmul.f32 %v928, 2.4142137
        %vm937 = vcmp.ge.f32.partialorder %v929, %v935
        %vm938 = vcmp.ge.f32.partialorder %v930, %v936
        %v939 = vmul.f32 %v880, %v896
        %v940 = vmul.f32 %v881, %v897
        %vm941 = vcmp.ge.f32.partialorder %v939, 0.0
        %vm942 = vcmp.ge.f32.partialorder %v940, 0.0
        %v945 = vrot.slane %v925, 2
        %v946 = vrot.slane %v926, 2
        %v947 = vsel %vm457, %v945, %v946
        %948 = vrot.lane.b32.xlu0 %v945, 2
        %v949 = vpop.permute.xlu0 %948
        %950 = vrot.lane.b32.xlu0 %v947, 2
        %v951 = vpop.permute.xlu0 %950
        %v956 = vsel %vm941, %v949, %v945
        %v957 = vsel %vm942, %v951, %v947
        %v958 = vrot.slane %v913, 2
        %v959 = vrot.slane %v914, 2
        %v960 = vsel %vm457, %v958, %v959
        %961 = vrot.lane.b32.xlu0 %v958, 2
        %v962 = vpop.permute.xlu0 %961
        %963 = vrot.lane.b32.xlu0 %v960, 2
        %v964 = vpop.permute.xlu0 %963
        %v967 = vsel %vm937, %v962, %v956
        %v968 = vsel %vm938, %v964, %v957
        %vm969 = vcmask 1044480
        %v970 = vrot.slane %v925, 3
        %v971 = vrot.slane %v926, 3
        %v972 = vsel %vm969, %v970, %v971
        %973 = vrot.lane.b32.xlu0 %v970, 2
        %v974 = vpop.permute.xlu0 %973
        %975 = vrot.lane.b32.xlu0 %v972, 2
        %v976 = vpop.permute.xlu0 %975
        %v979 = vsel %vm933, %v974, %v967
        %v980 = vsel %vm934, %v976, %v968
        %vm981 = vcmask 1043456
        %v982 = vrot.slane %v925, 4
        %v983 = vrot.slane %v926, 4
        %v984 = vsel %vm981, %v982, %v983
        %987 = vrot.lane.b32.xlu0 %v982, 2
        %v988 = vpop.permute.xlu0 %987
        %989 = vrot.lane.b32.xlu0 %v984, 2
        %v990 = vpop.permute.xlu0 %989
        %v993 = vsel %vm941, %v982, %v988
        %v994 = vsel %vm942, %v984, %v990
        %v995 = vrot.slane %v913, 4
        %v996 = vrot.slane %v914, 4
        %v997 = vsel %vm981, %v995, %v996
        %998 = vrot.lane.b32.xlu0 %v995, 2
        %v999 = vpop.permute.xlu0 %998
        %1000 = vrot.lane.b32.xlu0 %v997, 2
        %v1001 = vpop.permute.xlu0 %1000
        %v1004 = vsel %vm937, %v999, %v993
        %v1005 = vsel %vm938, %v1001, %v994
        %v1008 = vsel %vm933, %v970, %v1004
        %v1009 = vsel %vm934, %v972, %v1005
        %v1012 = vrot.slane %v979, 5
        %v1013 = vrot.slane %v980, 5
        %v1014 = vsel %vm901, %v1012, %v1013
        %1015 = vrot.lane.b32.xlu0 %v1014, 126
        %v1016 = vpop.permute.xlu0 %1015
        %1017 = vrot.lane.b32.xlu0 %v1013, 126
        %v1018 = vpop.permute.xlu0 %1017
        %vm1021 = vcmp.gt.f32.partialorder %v913, %v1016
        %vm1022 = vcmp.gt.f32.partialorder %v914, %v1018
        %v1025 = vrot.slane %v1008, 5
        %v1026 = vrot.slane %v1009, 5
        %v1027 = vsel %vm901, %v1025, %v1026
        %1028 = vrot.lane.b32.xlu0 %v1027, 126
        %v1029 = vpop.permute.xlu0 %1028
        %1030 = vrot.lane.b32.xlu0 %v1026, 126
        %v1031 = vpop.permute.xlu0 %1030
        %vm1034 = vcmp.ge.f32.partialorder %v913, %v1029
        %vm1035 = vcmp.ge.f32.partialorder %v914, %v1031
        %vm1036 = vmand %vm1021, %vm1034
        %vm1037 = vmand %vm1022, %vm1035
        %vm1038 = vcmp.gt.f32.partialorder %v913, 76.0
        %vm1039 = vcmp.gt.f32.partialorder %v914, 76.0
        %vm1040 = vmand %vm1036, %vm1038
        %vm1041 = vmand %vm1037, %vm1039
        %vm1042 = vcmp.gt.f32.partialorder %v913, 25.0
        %vm1043 = vcmp.gt.f32.partialorder %v914, 25.0
        %vm1044 = vmand %vm1036, %vm1042
        %vm1045 = vmand %vm1037, %vm1043
        %vm1046 = vmxor %vm1040, 1
        %vm1047 = vmxor %vm1041, 1
        %vm1048 = vmand %vm1044, %vm1046
        %vm1049 = vmand %vm1045, %vm1047
        %v1050 = vsel %vm1040, 1, 0
        %v1051 = vsel %vm1041, 1, 0
        %v1052 = vcvt.s32.f32 %v1050
        %v1053 = vcvt.s32.f32 %v1051
        %v1056 = vrot.slane %v1052, 1
        %v1057 = vrot.slane %v1053, 1
        %v1058 = vsel %vm442, %v1056, %v1057
        %1059 = vrot.lane.b32.xlu0 %v1058, 1
        %v1060 = vpop.permute.xlu0 %1059
        %1061 = vrot.lane.b32.xlu0 %v1057, 1
        %v1062 = vpop.permute.xlu0 %1061
        %v1065 = vsel %vm383, 0.0, %v1060
        %v1066 = vsel %vm383, 0.0, %v1062
        %v1067 = vsel %vm387, %v1065, 0.0
        %v1068 = vsel %vm387, %v1066, 0.0
        %1070 = vrot.lane.b32.xlu0 %v1067, 127
        %v1071 = vpop.permute.xlu0 %1070
        %v1073 = vadd.f32 %v1067, %v1071
        %1074 = vrot.lane.b32.xlu0 %v1067, 126
        %v1075 = vpop.permute.xlu0 %1074
        %v1077 = vadd.f32 %v1073, %v1075
        %v1079 = vrot.slane %v1067, 1
        %v1080 = vrot.slane %v1068, 1
        %v1081 = vsel %vm442, %v1079, %v1080
        %v1083 = vadd.f32 %v1077, %v1081
        %1084 = vrot.lane.b32.xlu0 %v1081, 126
        %v1085 = vpop.permute.xlu0 %1084
        %v1087 = vadd.f32 %v1083, %v1085
        %v1088 = vrot.slane %v1067, 2
        %v1089 = vrot.slane %v1068, 2
        %v1090 = vsel %vm457, %v1088, %v1089
        %v1092 = vadd.f32 %v1087, %v1090
        %1093 = vrot.lane.b32.xlu0 %v1090, 127
        %v1094 = vpop.permute.xlu0 %1093
        %v1096 = vadd.f32 %v1092, %v1094
        %1097 = vrot.lane.b32.xlu0 %v1090, 126
        %v1098 = vpop.permute.xlu0 %1097
        %v1100 = vadd.f32 %v1096, %v1098
        %vm1101 = vcmp.gt.f32.partialorder %v1100, 0.0
        %v1102 = vsel %vm1101, 1, 0
        %v1103 = vrot.slane %v1102, 6
        %vm1104 = vcmp.ne.s32.totalorder %v1103, 0
        %vm1105 = vmand %vm1048, %vm1104
        %vm1106 = vmand %vm1049, %vm1104
        %vm1107 = vmor %vm1040, %vm1105
        %vm1108 = vmor %vm1041, %vm1106
        %v1109 = vsel %vm1107, 1, 0
        %v1110 = vsel %vm1108, 1, 0
        %v1111 = vcvt.s32.f32 %v1109
        %v1112 = vcvt.s32.f32 %v1110
        %vm1113 = vcmask 130050
        %1114 = vst.msk [vmem:[%s312 - $0x2] sm:$0xfc] %vm1113, %v1111
        %vm1115 = vcmask 123904
        %1116 = vst.msk [vmem:[%s312 + $0x6] sm:$0x3] %vm1115, %v1112
        %s1117 = sand.u32 %s141, 1
        %s1118 = scalar_lea.sflag [#allocation4], %s1117
        %s1119 = sand.u32 %s141, 1
        %s1120 = smul.addr %s1119, 8
        %s1121 = scalar_lea.vmem [#allocation8], %s1120
        // Predicated region
        $region45: #{tpu_custom_call.1} parent=31 // pred_check
          %p1122 = pneg %p151
        $region46: #{tpu_custom_call.1} parent=31 // pred_check_branch
          %1124 = sbr.rel (%p1122) target = $region48
        $region47: #{tpu_custom_call.1} parent=31 // pred_region
          %1126 = vsyncadd %s1118, 0
          %s1127 = smul.addr %s27, 2
          %s1128 = sadd.s32 %s28, %s1127
          %s1129 = smul.addr %s1128, 8
          %s1130 = scalar_lea.hbm %s3, %s1129
          %s1132 = sshll.u32 %s1121, 4
          %s1133 = int_to_ptr.vmem [resolvable:$true] %s1132
          %s1134 = sshll.u32 %s1130, 4
          %s1135 = int_to_ptr.hbm [resolvable:$true] %s1134
          %1137 = dma.vmem_to_hbm [thread:$0]  %s1133, 128, %s1135, %s1118
        $region48: #{tpu_custom_call.1} parent=31 // pred_fallthru
          _
      $region32: #{tpu_custom_call.1} parent=5 // pred_fallthru
        _
      %p1138 = scmp.le.s32.totalorder 2, %s18
      // Predicated region
      $region49: #{tpu_custom_call.1} parent=5 // pred_check
        %p1139 = pneg %p1138
      $region50: #{tpu_custom_call.1} parent=5 // pred_check_branch
        %1141 = sbr.rel (%p1139) target = $region52
      $region51: #{tpu_custom_call.1} parent=5 // pred_region
        %s1142 = ssub.s32 %s18, 2
        // Predicated region
        $region53: #{tpu_custom_call.1} parent=51 // pred_check
          %p1143 = pneg %p157
        $region54: #{tpu_custom_call.1} parent=51 // pred_check_branch
          %1145 = sbr.rel (%p1143) target = $region56
        $region55: #{tpu_custom_call.1} parent=51 // pred_region
          %s1146 = sand.u32 %s142, 1
          %s1147 = scalar_lea.sflag [#allocation4], %s1146
          %s1148 = sand.u32 %s142, 1
          %s1149 = smul.addr %s1148, 8
          %s1150 = scalar_lea.vmem [#allocation8], %s1149
          %1152 = dma.done %s1147, 128
        $region56: #{tpu_custom_call.1} parent=51 // pred_fallthru
          _
      $region52: #{tpu_custom_call.1} parent=5 // pred_fallthru
        _
    $region6: #{tpu_custom_call.1} parent=1 // loop_footer
      %s22 = sadd.s32 1, %s18
    $region7: #{tpu_custom_call.1} parent=1 // loop_footer_branch
      %17 = sbr.rel target = $region3
    $region8: #{tpu_custom_call.1} parent=1 // loop_exit
      _
    %1153 = vsyncpa [#allocation3], 1
    %s1154 = scalar_lea.sflag [#allocation3], 1
    %1155 = vsyncpa %s1154, 1
    %1156 = vsyncpa [#allocation6], 1
    %s1157 = scalar_lea.sflag [#allocation6], 1
    %1158 = vsyncpa %s1157, 1
    %1159 = vsyncpa [#allocation4], 1
    %s1160 = scalar_lea.sflag [#allocation4], 1
    %1161 = vsyncpa %s1160, 1

</llo_original>
